<compile_context>
chip_gen: v7x
topology: tpu7x:2x2x1
jax: 0.10.0
libtpu: 0.0.40
codegen_flags: <defaults>
</compile_context>

<pallas_src>
import functools

import jax
import jax.numpy as jnp
from jax.experimental import pallas as pl
from jax.experimental.pallas import tpu as pltpu


_F32_EPS = float(jnp.finfo(jnp.float32).eps)
_MIB = 1024 * 1024
_ROOFLINE_KNEE_BYTES = 2 * _MIB   # per-buffer size past the measured HBM-roofline knee


# --------------------------------------------------------------------------- helpers
def _cdiv(a: int, b: int) -> int:
    return -(-a // b)


def _round_up(v: int, m: int) -> int:
    return _cdiv(v, m) * m


def _round_down(v: int, m: int) -> int:
    return (v // m) * m


def _tpu_budget():
    """Return (vmem_limit_bytes, num_tensorcores) for the current chip generation."""
    vmem_capacity = 64 * _MIB                 # conservative default = v7x per-TC VMEM
    try:
        vmem_capacity = int(pltpu.get_tpu_info().vmem_capacity_bytes)
    except Exception:                          # non-TPU backend / older API: stay conservative
        pass
    num_cores = 0
    try:
        num_cores = int(getattr(jax.devices()[0], "num_cores", 0))
    except Exception:
        pass
    if num_cores <= 0:
        # Heuristic: 64 MiB/TC generations (v7x) have 2 TensorCores per chip;
        # 128 MiB generations (v5e/v6e) have 1.
        num_cores = 2 if vmem_capacity <= 96 * _MIB else 1
    vmem_limit = (vmem_capacity * 3) // 4      # 96 MiB on v5e/v6e, 48 MiB on v7x
    return vmem_limit, num_cores


def _per_buffer_budget(vmem_limit: int, itemsize: int) -> int:
    # 6 live I/O buffers (3 arrays x double buffering) + ~4 tile-sized f32
    # temporaries inside the kernel (x_f32, square, att, slack).
    divisor = 6 + 4 * max(1, 4 // itemsize)
    return max(_MIB, vmem_limit // divisor)


def _inv_exact(denom):
    # EUP approximate reciprocal (separate VLIW slot) + 2 Newton refinements on the
    # tiny per-row scalar column -> full f32 accuracy at negligible VALU cost.
    inv = pl.reciprocal(denom, approx=True)
    inv = inv * (2.0 - denom * inv)
    inv = inv * (2.0 - denom * inv)
    return inv


# --------------------------------------------------------------------------- kernels
def _ssfc_rows_kernel(x_ref, y_ref, o_ref, *, inv_hw: float):
    """One (block_rows, H*W) tile; spatial reduction over the lane axis."""
    x = x_ref[...].astype(jnp.float32)
    # f32-accumulating reduction over y; y never gets a long-lived f32 copy.
    q = jnp.sum(y_ref[...].astype(jnp.float32), axis=-1, keepdims=True) * inv_hw
    square = (x - q) * (x - q)
    sigma = jnp.sum(square, axis=-1, keepdims=True) * inv_hw
    inv_denom = _inv_exact(2.0 * sigma + _F32_EPS)
    att_weight = jax.nn.sigmoid(square * inv_denom + 0.5)
    o_ref[...] = (x * att_weight).astype(o_ref.dtype)


def _ssfc_stats_kernel(x_ref, y_ref, sy_ref, sx_ref, sx2_ref, *, hw: int, hb: int):
    """Pass 1 of the huge-HW path: accumulate sum(y), sum(x), sum(x^2) per row."""
    j = pl.program_id(1)

    @pl.when(j == 0)
    def _():
        sy_ref[...] = jnp.zeros_like(sy_ref)
        sx_ref[...] = jnp.zeros_like(sx_ref)
        sx2_ref[...] = jnp.zeros_like(sx2_ref)

    x = x_ref[...].astype(jnp.float32)
    y = y_ref[...].astype(jnp.float32)
    # Mask lanes past the true spatial extent (ragged last H*W block).
    lane = jax.lax.broadcasted_iota(jnp.int32, x.shape, dimension=1)
    valid = (j * hb + lane) < hw
    x = jnp.where(valid, x, 0.0)
    y = jnp.where(valid, y, 0.0)
    sy_ref[...] += jnp.sum(y, axis=-1, keepdims=True)
    sx_ref[...] += jnp.sum(x, axis=-1, keepdims=True)
    sx2_ref[...] += jnp.sum(x * x, axis=-1, keepdims=True)


def _ssfc_apply_kernel(x_ref, sy_ref, sx_ref, sx2_ref, o_ref, *, inv_hw: float):
    """Pass 2 of the huge-HW path: elementwise attention weight + write."""
    x = x_ref[...].astype(jnp.float32)
    q = sy_ref[...] * inv_hw
    # sum((x - q)^2) = sum(x^2) - 2 q sum(x) + hw q^2  (clamped against f32 cancellation)
    sigma = jnp.maximum((sx2_ref[...] - 2.0 * q * sx_ref[...]) * inv_hw + q * q, 0.0)
    inv_denom = _inv_exact(2.0 * sigma + _F32_EPS)
    square = (x - q) * (x - q)
    att_weight = jax.nn.sigmoid(square * inv_denom + 0.5)
    o_ref[...] = (x * att_weight).astype(o_ref.dtype)


# --------------------------------------------------------------------------- tiling
def _pick_row_block(rows, hw, itemsize, budget, num_cores):
    """Row-block size for the single-pass kernel, or None if H*W is too large."""
    sub = max(8, 32 // itemsize)                   # sublane packing (8 f32 / 16 bf16 / 32 i8)
    lane_padded = _round_up(hw, 128)               # VMEM lane padding
    bytes_per_row = lane_padded * itemsize
    max_rows = _round_down(budget // bytes_per_row, sub)
    if max_rows < sub:
        return None                                # even a minimal tile blows the budget
    br = rows if max_rows >= rows else max_rows    # full-extent block is always layout-legal

    if num_cores >= 2 and rows > sub:
        # v7x: prefer an even number of (>=2) grid steps so both TensorCores get
        # equal work, but never shrink a tile below the ~2 MiB roofline knee.
        knee_rows = max(sub, _round_down(_ROOFLINE_KNEE_BYTES // bytes_per_row, sub))
        steps = _cdiv(rows, br)
        if steps % 2 == 1:
            cand = min(br, _round_up(_cdiv(rows, steps + 1), sub))
            if cand >= knee_rows and _cdiv(rows, cand) % 2 == 0:
                br = cand
    return br


# --------------------------------------------------------------------------- drivers
def _ssfc_single_pass(x2, y2, br, inv_hw, vmem_limit):
    rows, hw = x2.shape
    itemsize = jnp.dtype(x2.dtype).itemsize
    kernel = functools.partial(_ssfc_rows_kernel, inv_hw=inv_hw)
    cost = pl.CostEstimate(
        flops=8 * rows * hw,
        transcendentals=2 * rows * hw,             # sigmoid ~ exp + reciprocal
        bytes_accessed=3 * rows * hw * itemsize,   # 2 reads + 1 write, no wrapper transposes
    )
    return pl.pallas_call(
        kernel,
        out_shape=jax.ShapeDtypeStruct((rows, hw), x2.dtype),
        grid_spec=pltpu.PrefetchScalarGridSpec(
            num_scalar_prefetch=0,
            grid=(_cdiv(rows, br),),
            in_specs=[pl.BlockSpec((br, hw), lambda i: (i, 0)),
                      pl.BlockSpec((br, hw), lambda i: (i, 0))],
            out_specs=pl.BlockSpec((br, hw), lambda i: (i, 0)),
        ),
        compiler_params=pltpu.CompilerParams(
            dimension_semantics=("parallel",),
            vmem_limit_bytes=vmem_limit,
        ),
        cost_estimate=cost,
    )(x2, y2)


def _ssfc_two_pass(x2, y2, inv_hw, budget, vmem_limit):
    rows, hw = x2.shape
    dtype = x2.dtype
    itemsize = jnp.dtype(dtype).itemsize
    sub = max(8, 32 // itemsize)

    br = rows if rows <= sub else sub              # H*W is huge, keep the row tile minimal
    rows_pad = _round_up(br, sub)
    hb = max(128, _round_down(budget // (rows_pad * itemsize), 128))
    if hb >= hw:
        hb = hw
    n_r = _cdiv(rows, br)
    n_h = _cdiv(hw, hb)

    # Pass 1: per-row sums of y, x, x^2 (f32), accumulated over the H*W grid axis.
    stats_kernel = functools.partial(_ssfc_stats_kernel, hw=hw, hb=hb)
    sum_y, sum_x, sum_x2 = pl.pallas_call(
        stats_kernel,
        out_shape=tuple(jax.ShapeDtypeStruct((rows, 1), jnp.float32) for _ in range(3)),
        grid_spec=pltpu.PrefetchScalarGridSpec(
            num_scalar_prefetch=0,
            grid=(n_r, n_h),
            in_specs=[pl.BlockSpec((br, hb), lambda i, j: (i, j)),
                      pl.BlockSpec((br, hb), lambda i, j: (i, j))],
            out_specs=tuple(pl.BlockSpec((br, 1), lambda i, j: (i, 0)) for _ in range(3)),
        ),
        compiler_params=pltpu.CompilerParams(
            dimension_semantics=("parallel", "arbitrary"),
            vmem_limit_bytes=vmem_limit,
        ),
        cost_estimate=pl.CostEstimate(
            flops=4 * rows * hw, transcendentals=0,
            bytes_accessed=2 * rows * hw * itemsize),
    )(x2, y2)

    # Pass 2: elementwise attention weight + write, fully parallel.
    apply_kernel = functools.partial(_ssfc_apply_kernel, inv_hw=inv_hw)
    return pl.pallas_call(
        apply_kernel,
        out_shape=jax.ShapeDtypeStruct((rows, hw), dtype),
        grid_spec=pltpu.PrefetchScalarGridSpec(
            num_scalar_prefetch=0,
            grid=(n_r, n_h),
            in_specs=[pl.BlockSpec((br, hb), lambda i, j: (i, j)),
                      pl.BlockSpec((br, 1), lambda i, j: (i, 0)),
                      pl.BlockSpec((br, 1), lambda i, j: (i, 0)),
                      pl.BlockSpec((br, 1), lambda i, j: (i, 0))],
            out_specs=pl.BlockSpec((br, hb), lambda i, j: (i, j)),
        ),
        compiler_params=pltpu.CompilerParams(
            dimension_semantics=("parallel", "parallel"),
            vmem_limit_bytes=vmem_limit,
        ),
        cost_estimate=pl.CostEstimate(
            flops=8 * rows * hw, transcendentals=2 * rows * hw,
            bytes_accessed=2 * rows * hw * itemsize),
    )(x2, sum_y, sum_x, sum_x2)


def ssfc_forward(x, y, *, _tile_budget_override=None):
    """SSFC forward: x, y are NCHW arrays of identical shape."""
    assert x.shape == y.shape, "x and y must have the same NCHW shape"
    n, c, h, w = x.shape
    hw = h * w
    rows = n * c
    itemsize = jnp.dtype(x.dtype).itemsize
    inv_hw = 1.0 / float(hw)

    vmem_limit, num_cores = _tpu_budget()
    budget = _per_buffer_budget(vmem_limit, itemsize)
    if _tile_budget_override is not None:          # test hook: force the two-pass path
        budget = int(_tile_budget_override)

    # Free, metadata-only reshapes; no wrapper-side transposes for any shape.
    x2 = x.reshape(rows, hw)
    y2 = y.reshape(rows, hw)

    br = _pick_row_block(rows, hw, itemsize, budget, num_cores)
    if br is not None:
        out = _ssfc_single_pass(x2, y2, br, inv_hw, vmem_limit)
    else:
        out = _ssfc_two_pass(x2, y2, inv_hw, budget, vmem_limit)
    return out.reshape(n, c, h, w)


# --------------------------------------------------------------------------- reference / test
def _ssfc_reference(x, y):
    # Pure-JAX reference mirroring the PyTorch module.
    h, w = x.shape[2], x.shape[3]
    q = jnp.mean(y, axis=(2, 3), keepdims=True)
    square = (x - q) ** 2
    sigma = jnp.sum(square, axis=(2, 3), keepdims=True) / (h * w)
    att_score = square / (2 * sigma + jnp.finfo(jnp.float32).eps) + 0.5
    att_weight = jax.nn.sigmoid(att_score)
    return x * att_weight


if __name__ == "__main__":
    key = jax.random.PRNGKey(0)
    kx, ky, kx2, ky2, kx3, ky3 = jax.random.split(key, 6)

    # SSFC has no learnable parameters; the forward takes two NCHW tensors.
    x = jax.random.normal(kx, (2, 4, 16, 16), dtype=jnp.float32)
    y = jax.random.normal(ky, (2, 4, 16, 16), dtype=jnp.float32)
    out = jax.block_until_ready(ssfc_forward(x, y))
    ref = _ssfc_reference(x, y)
    assert out.shape == x.shape
    assert jnp.allclose(out, ref, atol=1e-5, rtol=1e-5), "mismatch (lane-dense HW)"

    # Small-HW shape (7x7 = 49 < 128): same rows path, no wrapper transposes.
    x_s = jax.random.normal(kx2, (2, 64, 7, 7), dtype=jnp.float32)
    y_s = jax.random.normal(ky2, (2, 64, 7, 7), dtype=jnp.float32)
    out_s = jax.block_until_ready(ssfc_forward(x_s, y_s))
    assert out_s.shape == x_s.shape
    assert jnp.allclose(out_s, _ssfc_reference(x_s, y_s), atol=1e-5, rtol=1e-5), \
        "mismatch (small-HW path)"

    # Exercise the huge-HW two-pass fallback (ragged H*W block included) by
    # forcing a tiny per-buffer budget; the real trigger is f32 H*W >~ 512*512.
    x_l = jax.random.normal(kx3, (2, 4, 30, 30), dtype=jnp.float32)
    y_l = jax.random.normal(ky3, (2, 4, 30, 30), dtype=jnp.float32)
    out_l = jax.block_until_ready(ssfc_forward(x_l, y_l, _tile_budget_override=16 * 1024))
    assert out_l.shape == x_l.shape
    assert jnp.allclose(out_l, _ssfc_reference(x_l, y_l), atol=1e-5, rtol=1e-5), \
        "mismatch (two-pass huge-HW path)"

    print("KERNEL_OK")
</pallas_src>

<mosaic_0001>
module attributes {stable_mosaic.version = 11 : i64} {
  func.func @_ssfc_rows_kernel(%arg0: i32, %arg1: memref<8x256xf32, #tpu.memory_space<vmem>>, %arg2: memref<8x256xf32, #tpu.memory_space<vmem>>, %arg3: memref<8x256xf32, #tpu.memory_space<vmem>>) attributes {dimension_semantics = [#tpu.dimension_semantics<parallel>], iteration_bounds = array<i64: 1>, scalar_prefetch = 0 : i64, scratch_operands = 0 : i64, tpu.core_type = #tpu.core_type<tc>, window_params = [{transform_indices = @transform_0, window_bounds = array<i64: 8, 256>}, {transform_indices = @transform_1, window_bounds = array<i64: 8, 256>}, {transform_indices = @transform_2, window_bounds = array<i64: 8, 256>}]} {
    %c0 = arith.constant 0 : index
    %c0_0 = arith.constant 0 : index
    %0 = vector.load %arg1[%c0, %c0_0] : memref<8x256xf32, #tpu.memory_space<vmem>>, vector<8x256xf32>
    %c0_1 = arith.constant 0 : index
    %c0_2 = arith.constant 0 : index
    %1 = vector.load %arg2[%c0_1, %c0_2] : memref<8x256xf32, #tpu.memory_space<vmem>>, vector<8x256xf32>
    %cst = arith.constant dense<0.000000e+00> : vector<8xf32>
    %2 = vector.multi_reduction <add>, %1, %cst [1] : vector<8x256xf32> to vector<8xf32>
    %3 = vector.shape_cast %2 : vector<8xf32> to vector<8x1xf32>
    %cst_3 = arith.constant 3.906250e-03 : f32
    %4 = vector.broadcast %cst_3 : f32 to vector<8x1xf32>
    %5 = arith.mulf %3, %4 : vector<8x1xf32>
    %6 = vector.broadcast %5 : vector<8x1xf32> to vector<8x256xf32>
    %7 = arith.subf %0, %6 : vector<8x256xf32>
    %8 = vector.broadcast %5 : vector<8x1xf32> to vector<8x256xf32>
    %9 = arith.subf %0, %8 : vector<8x256xf32>
    %10 = arith.mulf %7, %9 : vector<8x256xf32>
    %cst_4 = arith.constant dense<0.000000e+00> : vector<8xf32>
    %11 = vector.multi_reduction <add>, %10, %cst_4 [1] : vector<8x256xf32> to vector<8xf32>
    %12 = vector.shape_cast %11 : vector<8xf32> to vector<8x1xf32>
    %cst_5 = arith.constant 3.906250e-03 : f32
    %13 = vector.broadcast %cst_5 : f32 to vector<8x1xf32>
    %14 = arith.mulf %12, %13 : vector<8x1xf32>
    %cst_6 = arith.constant 2.000000e+00 : f32
    %15 = vector.broadcast %cst_6 : f32 to vector<8x1xf32>
    %16 = arith.mulf %15, %14 : vector<8x1xf32>
    %cst_7 = arith.constant 1.1920929E-7 : f32
    %17 = vector.broadcast %cst_7 : f32 to vector<8x1xf32>
    %18 = arith.addf %16, %17 : vector<8x1xf32>
    %19 = tpu.reciprocal %18 {approx = true} : vector<8x1xf32> -> vector<8x1xf32>
    %20 = arith.mulf %18, %19 : vector<8x1xf32>
    %cst_8 = arith.constant 2.000000e+00 : f32
    %21 = vector.broadcast %cst_8 : f32 to vector<8x1xf32>
    %22 = arith.subf %21, %20 : vector<8x1xf32>
    %23 = arith.mulf %19, %22 : vector<8x1xf32>
    %24 = arith.mulf %18, %23 : vector<8x1xf32>
    %cst_9 = arith.constant 2.000000e+00 : f32
    %25 = vector.broadcast %cst_9 : f32 to vector<8x1xf32>
    %26 = arith.subf %25, %24 : vector<8x1xf32>
    %27 = arith.mulf %23, %26 : vector<8x1xf32>
    %28 = vector.broadcast %27 : vector<8x1xf32> to vector<8x256xf32>
    %29 = arith.mulf %10, %28 : vector<8x256xf32>
    %cst_10 = arith.constant 5.000000e-01 : f32
    %30 = vector.broadcast %cst_10 : f32 to vector<8x256xf32>
    %31 = arith.addf %29, %30 : vector<8x256xf32>
    %32 = arith.negf %31 : vector<8x256xf32>
    %33 = math.exp %32 : vector<8x256xf32>
    %cst_11 = arith.constant 1.000000e+00 : f32
    %34 = vector.broadcast %cst_11 : f32 to vector<8x256xf32>
    %35 = arith.addf %34, %33 : vector<8x256xf32>
    %36 = arith.divf %34, %35 : vector<8x256xf32>
    %37 = arith.mulf %0, %36 : vector<8x256xf32>
    %c0_12 = arith.constant 0 : index
    %c0_13 = arith.constant 0 : index
    %38 = vector.load %arg3[%c0_12, %c0_13] : memref<8x256xf32, #tpu.memory_space<vmem>>, vector<8x256xf32>
    tpu.vector_store %arg3[%c0_12, %c0_13], %37 {strides = array<i32>} : memref<8x256xf32, #tpu.memory_space<vmem>>, vector<8x256xf32>,
    return
  }
  func.func @transform_0(%arg0: i32) -> (i32, i32) {
    %c0_i32 = arith.constant 0 : i32
    %c0_i32_0 = arith.constant 0 : i32
    return %arg0, %c0_i32 : i32, i32
  }
  func.func @transform_1(%arg0: i32) -> (i32, i32) {
    %c0_i32 = arith.constant 0 : i32
    %c0_i32_0 = arith.constant 0 : i32
    return %arg0, %c0_i32 : i32, i32
  }
  func.func @transform_2(%arg0: i32) -> (i32, i32) {
    %c0_i32 = arith.constant 0 : i32
    %c0_i32_0 = arith.constant 0 : i32
    return %arg0, %c0_i32 : i32, i32
  }
}

</mosaic_0001>

<llo_original>
// kernel: tpu_custom_call.1
$region0: #{tpu_custom_call.1}
  #allocation0 [shape = 'u32[]', space=smem, size = 0x4, offset = 0x4, fixed_abs, tag = 'smem constant byte address 0x4 - core index']
  #allocation1 [shape = 'u32[144,128]{1,0:T(1,128)}', space=vmem, size = 0x12000, scoped, tag = 'internal scratch']
  %s0 = inlined_call_operand.hbm [shape: f32[8,256], index: 0, kind: input, shape index: {}]
  %s1 = inlined_call_operand.hbm [shape: f32[8,256], index: 1, kind: input, shape index: {}]
  %s2 = inlined_call_operand.hbm [shape: f32[8,256], index: 2, kind: output, shape index: {}]
  %s3 = sld [smem:[#allocation0]]
  $region26: #{tpu_custom_call.1} parent=0
    _
  %s5 = ssub.s32 1, %s3
  %s6 = scalar_select 0, %s5, %s3
  $region1: #{tpu_custom_call.1} parent=0
    #allocation2 [shape = 'u8[8192]{0}', space=vmem, size = 0x2000, scoped, tag = 'input window, operand 0, single buffered']
    #allocation3 [shape = 's32[1]{0}', space=sflag, size = 0x4, scoped, tag = 'scoped memory for tpu_custom_call.1']
    #allocation4 [shape = 's32[1]{0}', space=sflag, size = 0x4, scoped, tag = 'scoped memory for tpu_custom_call.1']
    #allocation5 [shape = 'u8[8192]{0}', space=vmem, size = 0x2000, scoped, tag = 'input window, operand 1, single buffered']
    #allocation6 [shape = 's32[1]{0}', space=sflag, size = 0x4, scoped, tag = 'scoped memory for tpu_custom_call.1']
    #allocation7 [shape = 'u8[8192]{0}', space=vmem, size = 0x2000, scoped, tag = 'output window, operand 0, single buffered']
    %7 = vsyncpa [#allocation3], 0
    %8 = vsyncpa [#allocation6], 0
    %9 = vsyncpa [#allocation4], 0
    // Predicated region
    $region2: #{tpu_custom_call.1} parent=1 // pred_check
      _
    $region3: #{tpu_custom_call.1} parent=1 // pred_check_branch
      %11 = sbr.rel (0) target = $region5
    $region4: #{tpu_custom_call.1} parent=1 // pred_region
      %s13 = ssub.s32 256, 256
      %14 = vsyncadd [#allocation3], %s13
      %s16 = sshll.u32 [#allocation2], 4
      %s17 = int_to_ptr.vmem [resolvable:$true] %s16
      %19 = dma.hbm_to_vmem [thread:$0]  %s0, 256, %s17, [#allocation3]
    $region5: #{tpu_custom_call.1} parent=1 // pred_fallthru
      _
    // Predicated region
    $region6: #{tpu_custom_call.1} parent=1 // pred_check
      _
    $region7: #{tpu_custom_call.1} parent=1 // pred_check_branch
      %21 = sbr.rel (0) target = $region9
    $region8: #{tpu_custom_call.1} parent=1 // pred_region
      %s23 = ssub.s32 256, 256
      %24 = vsyncadd [#allocation6], %s23
      %s26 = sshll.u32 [#allocation5], 4
      %s27 = int_to_ptr.vmem [resolvable:$true] %s26
      %29 = dma.hbm_to_vmem [thread:$0]  %s1, 256, %s27, [#allocation6]
    $region9: #{tpu_custom_call.1} parent=1 // pred_fallthru
      _
    // Predicated region
    $region10: #{tpu_custom_call.1} parent=1 // pred_check
      _
    $region11: #{tpu_custom_call.1} parent=1 // pred_check_branch
      %31 = sbr.rel (0) target = $region13
    $region12: #{tpu_custom_call.1} parent=1 // pred_region
      %32 = dma.done [#allocation3], 256
    $region13: #{tpu_custom_call.1} parent=1 // pred_fallthru
      _
    // Predicated region
    $region14: #{tpu_custom_call.1} parent=1 // pred_check
      _
    $region15: #{tpu_custom_call.1} parent=1 // pred_check_branch
      %34 = sbr.rel (0) target = $region17
    $region16: #{tpu_custom_call.1} parent=1 // pred_region
      %35 = dma.done [#allocation6], 256
    $region17: #{tpu_custom_call.1} parent=1 // pred_fallthru
      _
    %v36 = vld [vmem:[#allocation2] sm:$0xff]
    %v37 = vld [vmem:[#allocation2 + $0x8] sm:$0xff]
    %v38 = vld [vmem:[#allocation5] sm:$0xff]
    %v39 = vld [vmem:[#allocation5 + $0x8] sm:$0xff]
    %v40 = vadd.f32 %v38, %v39
    %41 = vadd.xlane.f32.xlu0 %v40
    %v42 = vpop.xlane.xlu0 %41
    %v43 = vmul.f32 %v42, 0.00390625
    %v44 = vsub.f32 %v36, %v43
    %v45 = vsub.f32 %v37, %v43
    %v46 = vmul.f32 %v44, %v44
    %v47 = vmul.f32 %v45, %v45
    %v48 = vadd.f32 %v46, %v47
    %49 = vadd.xlane.f32.xlu0 %v48
    %v50 = vpop.xlane.xlu0 %49
    %v51 = vmul.f32 %v50, 0.00390625
    %v52 = vmul.f32 %v51, 2.0
    %v53 = vadd.f32 %v52, 1.1920929e-07
    %v54 = vrcp.pop %v53
    %v55 = vmul.f32 %v53, %v54
    %v56 = vsub.f32 2.0, %v55
    %v57 = vmul.f32 %v54, %v56
    %v58 = vmul.f32 %v53, %v57
    %v59 = vsub.f32 2.0, %v58
    %v60 = vmul.f32 %v57, %v59
    %v61 = vmul.f32 %v46, %v60
    %v62 = vmul.f32 %v47, %v60
    %v63 = vadd.f32 %v61, 0.5
    %v64 = vadd.f32 %v62, 0.5
    %v65 = vxor.u32 %v63, 2147483648
    %v66 = vxor.u32 %v64, 2147483648
    %v67 = vmul.f32 %v65, 1.442695
    %v68 = vpow.pop %v67
    %v69 = vmul.f32 %v66, 1.442695
    %v70 = vpow.pop %v69
    %v71 = vadd.f32 %v68, 1.0
    %v72 = vadd.f32 %v70, 1.0
    %v73 = vrcp.pop %v71
    %v74 = vmul.f32 1.0, %v73
    %v75 = vrcp.pop %v72
    %v76 = vmul.f32 1.0, %v75
    %v77 = vmul.f32 %v36, %v74
    %v78 = vmul.f32 %v37, %v76
    %79 = vst [vmem:[#allocation7] sm:$0xff] %v77
    %80 = vst [vmem:[#allocation7 + $0x8] sm:$0xff] %v78
    // Predicated region
    $region18: #{tpu_custom_call.1} parent=1 // pred_check
      _
    $region19: #{tpu_custom_call.1} parent=1 // pred_check_branch
      %82 = sbr.rel (0) target = $region21
    $region20: #{tpu_custom_call.1} parent=1 // pred_region
      %s84 = ssub.s32 256, 256
      %85 = vsyncadd [#allocation4], %s84
      %s87 = sshll.u32 [#allocation7], 4
      %s88 = int_to_ptr.vmem [resolvable:$true] %s87
      %90 = dma.vmem_to_hbm [thread:$0]  %s88, 256, %s2, [#allocation4]
    $region21: #{tpu_custom_call.1} parent=1 // pred_fallthru
      _
    // Predicated region
    $region22: #{tpu_custom_call.1} parent=1 // pred_check
      _
    $region23: #{tpu_custom_call.1} parent=1 // pred_check_branch
      %92 = sbr.rel (0) target = $region25
    $region24: #{tpu_custom_call.1} parent=1 // pred_region
      %93 = dma.done [#allocation4], 256
    $region25: #{tpu_custom_call.1} parent=1 // pred_fallthru
      _
    %94 = vsyncpa [#allocation3], 1
    %95 = vsyncpa [#allocation6], 1
    %96 = vsyncpa [#allocation4], 1

</llo_original>
